<compile_context>
chip_gen: v7x
topology: tpu7x:2x2x1
jax: 0.10.0
libtpu: 0.0.40
codegen_flags: <defaults>
</compile_context>

<pallas_src>
import functools

import jax
import jax.numpy as jnp
from jax import lax
from jax.experimental import pallas as pl
from jax.experimental.pallas import tpu as pltpu  # noqa: F401  (TPU backend)


# ---------------------------------------------------------------------------
# Single fused kernel: Conv2d (+bias, +contributions) -> ReLU -> Flatten ->
# Linear (+bias, +contributions).  Everything is one VMEM-resident block.
# ---------------------------------------------------------------------------
def _fused_kernel(n_conv, p_ref, wc_ref, bc_ref, wl_ref, bl_ref, o1_ref, o2_ref):
    """Fused forward.

    p_ref : (M, K)        im2col patches, M = N*Ho*Wo, K = Cin*kh*kw.
    wc_ref: (n1, K)       rows = [conv weight | batched contribution weights].
    bc_ref: (n1, 1)       conv bias on first n_conv rows, zeros elsewhere.
    wl_ref: (n_conv, M, C) per-channel linear weights, block-diagonal over the
                           sample dim (C = N*(1+Bw)*out_f).
    bl_ref: (1, C)        linear bias (tiled per sample), zeros on contrib cols.
    o1_ref: (n1, M)       conv preact (+bias) | contributions, channel-major.
    o2_ref: (1, C)        linear out (+bias) | contributions, per-sample blocks.
    """
    # Conv stage: (n1, K) x (M, K)^T -> (n1, M).  M = 128 lanes -> unmasked vst.
    acc1 = lax.dot_general(
        wc_ref[...], p_ref[...],
        dimension_numbers=(((1,), (1,)), ((), ())),      # contract K vs K
        preferred_element_type=jnp.float32,
    )                                                    # (n1, M)
    acc1 = acc1 + bc_ref[...]                            # bias only on conv rows
    o1_ref[...] = acc1                                   # single lane-dense store

    # Fused ReLU, stays in registers; (n_conv, M) with m = n*Ho*Wo + s.
    h = jnp.maximum(acc1[:n_conv, :], 0.0)

    # Linear stage: out[n, j] = sum_{c,s} h[c, n*HW+s] * lin_w[j, c*HW+s].
    # wl_ref[c] is (M, C) and block-diagonal over samples, so contracting the
    # full lane dim M per channel needs no reshape/transpose of activations.
    acc2 = bl_ref[...]                                   # (1, C), start from bias
    for c in range(n_conv):                              # static unroll (8 matmuls)
        acc2 = acc2 + lax.dot_general(
            h[c:c + 1, :], wl_ref[c],
            dimension_numbers=(((1,), (0,)), ((), ())),
            preferred_element_type=jnp.float32,
        )
    o2_ref[...] = acc2                                   # (1, C) lane-dense store


def _fused_forward(patches, w_conv_all, b_conv_col, w_lin_stack, b_lin_row, *, n_conv):
    M, K = patches.shape
    n1 = w_conv_all.shape[0]
    C = w_lin_stack.shape[2]
    cost = pl.CostEstimate(
        flops=2 * n1 * M * K + 2 * n_conv * M * C,
        transcendentals=0,
        bytes_accessed=4 * (M * K + n1 * K + n1 + n_conv * M * C + C + n1 * M + C),
    )
    return pl.pallas_call(
        functools.partial(_fused_kernel, n_conv),
        out_shape=(jax.ShapeDtypeStruct((n1, M), jnp.float32),
                   jax.ShapeDtypeStruct((1, C), jnp.float32)),
        cost_estimate=cost,
    )(patches, w_conv_all, b_conv_col, w_lin_stack, b_lin_row)


# ---------------------------------------------------------------------------
# SequentialWrapper.forward equivalent
# ---------------------------------------------------------------------------
def sequential_wrapper_forward(x, weights_batch, weights_batch_size, params):
    """Returns (x, contributions, preactivations) matching the PyTorch module."""
    conv_w = params["conv_w"]          # (Cout, Cin, kh, kw)
    conv_b = params["conv_b"]          # (Cout,)
    lin_w = params["lin_w"]            # (out_f, in_f)
    lin_b = params["lin_b"]            # (out_f,)
    Cout, Cin, kh, kw = conv_w.shape
    out_f, in_f = lin_w.shape
    Bw = weights_batch_size
    N, _, H, W = x.shape
    Ho, Wo = H, W                      # 3x3, stride 1, padding 1
    HW = Ho * Wo
    M = N * HW
    K = Cin * kh * kw

    # -- im2col: one XLA op (0/1 indicator conv at HIGHEST precision -> exact) --
    patches = lax.conv_general_dilated_patches(
        x, (kh, kw), (1, 1), ((1, 1), (1, 1)),
        precision=lax.Precision.HIGHEST)                 # (N, Cin*kh*kw, Ho, Wo), c-major
    patches = patches.transpose(0, 2, 3, 1).reshape(M, K)

    # -- conv-stage weights: [actual conv weight | batched contribution weights] --
    wb_conv = weights_batch["group0.param0"]             # (Bw, Cout, Cin, kh, kw)
    w_conv_all = jnp.concatenate(
        [conv_w.reshape(Cout, K), wb_conv.reshape(Bw * Cout, K)], axis=0)   # (n1, K)
    n1 = (1 + Bw) * Cout
    b_conv_col = jnp.concatenate(
        [conv_b, jnp.zeros((Bw * Cout,), conv_b.dtype)]).reshape(n1, 1)

    # -- linear-stage weights: per-channel stack, block-diagonal over samples --
    wb_lin = weights_batch["group0.param2"]              # (Bw, out_f, in_f)
    lin_w_all = jnp.concatenate(
        [lin_w, wb_lin.reshape(Bw * out_f, in_f)], axis=0)                  # (n2, in_f)
    n2 = (1 + Bw) * out_f
    base = lin_w_all.reshape(n2, Cout, HW).transpose(1, 2, 0)               # (Cout, HW, n2)
    w_lin_stack = (jnp.eye(N, dtype=base.dtype)[None, :, None, :, None]
                   * base[:, None, :, None, :]).reshape(Cout, N * HW, N * n2)
    b_lin_row = jnp.tile(
        jnp.concatenate([lin_b, jnp.zeros((Bw * out_f,), lin_b.dtype)]), N
    ).reshape(1, N * n2)

    # -- one fused pallas_call for the whole forward --
    o1, o2 = _fused_forward(patches, w_conv_all, b_conv_col,
                            w_lin_stack, b_lin_row, n_conv=Cout)

    # -- unpack (tiny leading-dim reshapes/transposes, XLA glue) --
    pre0 = o1[:Cout].reshape(Cout, N, Ho, Wo).transpose(1, 0, 2, 3)          # (N,Cout,Ho,Wo)
    contrib0 = (o1[Cout:].reshape(Bw, Cout, N, Ho, Wo)
                .transpose(2, 0, 1, 3, 4))                                   # (N,Bw,Cout,Ho,Wo)
    o2r = o2.reshape(N, n2)
    x_out = o2r[:, :out_f]                                                   # (N, out_f)
    contrib1 = o2r[:, out_f:].reshape(N, Bw, out_f)                          # (N, Bw, out_f)

    return x_out, [contrib0, contrib1], [pre0, x_out]


# ---------------------------------------------------------------------------
# Independent pure-XLA reference (real convolutions, HIGHEST precision)
# ---------------------------------------------------------------------------
def _reference(x, weights_batch, Bw, params):
    conv_w, conv_b = params["conv_w"], params["conv_b"]
    lin_w, lin_b = params["lin_w"], params["lin_b"]
    Cout, Cin, kh, kw = conv_w.shape
    out_f, in_f = lin_w.shape
    N = x.shape[0]
    dn = ("NCHW", "OIHW", "NCHW")
    hp = lax.Precision.HIGHEST

    pre0 = lax.conv_general_dilated(x, conv_w, (1, 1), ((1, 1), (1, 1)),
                                    dimension_numbers=dn, precision=hp)
    pre0 = pre0 + conv_b[None, :, None, None]
    wbc = weights_batch["group0.param0"].reshape(-1, Cin, kh, kw)
    c0 = lax.conv_general_dilated(x, wbc, (1, 1), ((1, 1), (1, 1)),
                                  dimension_numbers=dn, precision=hp)
    c0 = c0.reshape(N, Bw, Cout, *c0.shape[2:])

    h = jnp.maximum(pre0, 0.0).reshape(N, -1)            # NCHW flatten (torch order)
    out = jnp.dot(h, lin_w.T, precision=hp) + lin_b
    wbl = weights_batch["group0.param2"].reshape(-1, in_f)
    c1 = jnp.dot(h, wbl.T, precision=hp).reshape(N, Bw, out_f)
    return out, [c0, c1], [pre0, out]


# ---------------------------------------------------------------------------
if __name__ == "__main__":
    key = jax.random.PRNGKey(0)
    N, Cin, H, W = 2, 4, 8, 8
    Cout, kh, kw = 8, 3, 3
    out_f = 16
    in_f = Cout * H * W
    Bw = 3  # weights_batch_size

    k = jax.random.split(key, 7)
    x = jax.random.normal(k[0], (N, Cin, H, W), jnp.float32)
    params = {
        "conv_w": 0.1 * jax.random.normal(k[1], (Cout, Cin, kh, kw), jnp.float32),
        "conv_b": 0.1 * jax.random.normal(k[2], (Cout,), jnp.float32),
        "lin_w": 0.05 * jax.random.normal(k[3], (out_f, in_f), jnp.float32),
        "lin_b": 0.05 * jax.random.normal(k[4], (out_f,), jnp.float32),
    }
    weights_batch = {
        "group0.param0": 0.1 * jax.random.normal(k[5], (Bw, Cout, Cin, kh, kw), jnp.float32),
        "group0.param2": 0.05 * jax.random.normal(k[6], (Bw, out_f, in_f), jnp.float32),
    }

    fwd = jax.jit(sequential_wrapper_forward, static_argnums=2)
    out, contribs, preacts = jax.block_until_ready(fwd(x, weights_batch, Bw, params))

    # Shape checks (match the PyTorch module's return structure).
    assert out.shape == (N, out_f)
    assert contribs[0].shape == (N, Bw, Cout, H, W)
    assert contribs[1].shape == (N, Bw, out_f)
    assert preacts[0].shape == (N, Cout, H, W)
    assert preacts[1].shape == (N, out_f)

    # Numerical check against an independent XLA reference path.
    ref_out, ref_contribs, ref_preacts = _reference(x, weights_batch, Bw, params)
    for a, b in zip([out] + contribs + preacts, [ref_out] + ref_contribs + ref_preacts):
        assert jnp.allclose(a, b, atol=2e-3, rtol=2e-3), float(jnp.max(jnp.abs(a - b)))

    print("KERNEL_OK")
</pallas_src>

<mosaic_0001>
module attributes {stable_mosaic.version = 11 : i64} {
  func.func @_fused_kernel(%arg0: memref<128x36xf32, #tpu.memory_space<vmem>>, %arg1: memref<32x36xf32, #tpu.memory_space<vmem>>, %arg2: memref<32x1xf32, #tpu.memory_space<vmem>>, %arg3: memref<8x128x128xf32, #tpu.memory_space<vmem>>, %arg4: memref<1x128xf32, #tpu.memory_space<vmem>>, %arg5: memref<32x128xf32, #tpu.memory_space<vmem>>, %arg6: memref<1x128xf32, #tpu.memory_space<vmem>>) attributes {dimension_semantics = [], scalar_prefetch = 0 : i64, scratch_operands = 0 : i64, tpu.core_type = #tpu.core_type<tc>} {
    %c0 = arith.constant 0 : index
    %c0_0 = arith.constant 0 : index
    %0 = vector.load %arg1[%c0, %c0_0] : memref<32x36xf32, #tpu.memory_space<vmem>>, vector<32x36xf32>
    %c0_1 = arith.constant 0 : index
    %c0_2 = arith.constant 0 : index
    %1 = vector.load %arg0[%c0_1, %c0_2] : memref<128x36xf32, #tpu.memory_space<vmem>>, vector<128x36xf32>
    %cst = arith.constant dense<0.000000e+00> : vector<32x128xf32>
    %2 = tpu.matmul %0, %1, %cst {dimension_numbers = #tpu.dot_dimension_numbers<[1], [1], [0], [0], [0, 0, 1, 0], [], []>} : vector<32x36xf32>, vector<128x36xf32>, vector<32x128xf32> -> vector<32x128xf32>
    %c0_3 = arith.constant 0 : index
    %c0_4 = arith.constant 0 : index
    %3 = vector.load %arg2[%c0_3, %c0_4] : memref<32x1xf32, #tpu.memory_space<vmem>>, vector<32x1xf32>
    %4 = vector.broadcast %3 : vector<32x1xf32> to vector<32x128xf32>
    %5 = arith.addf %2, %4 : vector<32x128xf32>
    %c0_5 = arith.constant 0 : index
    %c0_6 = arith.constant 0 : index
    %6 = vector.load %arg5[%c0_5, %c0_6] : memref<32x128xf32, #tpu.memory_space<vmem>>, vector<32x128xf32>
    tpu.vector_store %arg5[%c0_5, %c0_6], %5 {strides = array<i32>} : memref<32x128xf32, #tpu.memory_space<vmem>>, vector<32x128xf32>,
    %7 = vector.extract_strided_slice %5 {offsets = [0, 0], sizes = [8, 128], strides = [1, 1]} : vector<32x128xf32> to vector<8x128xf32>
    %cst_7 = arith.constant 0.000000e+00 : f32
    %8 = vector.broadcast %cst_7 : f32 to vector<8x128xf32>
    %9 = arith.maximumf %7, %8 : vector<8x128xf32>
    %c0_8 = arith.constant 0 : index
    %c0_9 = arith.constant 0 : index
    %10 = vector.load %arg4[%c0_8, %c0_9] : memref<1x128xf32, #tpu.memory_space<vmem>>, vector<1x128xf32>
    %11 = vector.extract_strided_slice %9 {offsets = [0, 0], sizes = [1, 128], strides = [1, 1]} : vector<8x128xf32> to vector<1x128xf32>
    %c0_10 = arith.constant 0 : index
    %c0_11 = arith.constant 0 : index
    %c0_12 = arith.constant 0 : index
    %12 = vector.load %arg3[%c0_10, %c0_11, %c0_12] : memref<8x128x128xf32, #tpu.memory_space<vmem>>, vector<1x128x128xf32>
    %13 = vector.shape_cast %12 : vector<1x128x128xf32> to vector<128x128xf32>
    %cst_13 = arith.constant dense<0.000000e+00> : vector<1x128xf32>
    %14 = tpu.matmul %11, %13, %cst_13 {dimension_numbers = #tpu.dot_dimension_numbers<[1], [0], [0], [1], [0, 0, 1, 1], [], []>} : vector<1x128xf32>, vector<128x128xf32>, vector<1x128xf32> -> vector<1x128xf32>
    %15 = arith.addf %10, %14 : vector<1x128xf32>
    %16 = vector.extract_strided_slice %9 {offsets = [1, 0], sizes = [1, 128], strides = [1, 1]} : vector<8x128xf32> to vector<1x128xf32>
    %c1 = arith.constant 1 : index
    %c0_14 = arith.constant 0 : index
    %c0_15 = arith.constant 0 : index
    %17 = vector.load %arg3[%c1, %c0_14, %c0_15] : memref<8x128x128xf32, #tpu.memory_space<vmem>>, vector<1x128x128xf32>
    %18 = vector.shape_cast %17 : vector<1x128x128xf32> to vector<128x128xf32>
    %cst_16 = arith.constant dense<0.000000e+00> : vector<1x128xf32>
    %19 = tpu.matmul %16, %18, %cst_16 {dimension_numbers = #tpu.dot_dimension_numbers<[1], [0], [0], [1], [0, 0, 1, 1], [], []>} : vector<1x128xf32>, vector<128x128xf32>, vector<1x128xf32> -> vector<1x128xf32>
    %20 = arith.addf %15, %19 : vector<1x128xf32>
    %21 = vector.extract_strided_slice %9 {offsets = [2, 0], sizes = [1, 128], strides = [1, 1]} : vector<8x128xf32> to vector<1x128xf32>
    %c2 = arith.constant 2 : index
    %c0_17 = arith.constant 0 : index
    %c0_18 = arith.constant 0 : index
    %22 = vector.load %arg3[%c2, %c0_17, %c0_18] : memref<8x128x128xf32, #tpu.memory_space<vmem>>, vector<1x128x128xf32>
    %23 = vector.shape_cast %22 : vector<1x128x128xf32> to vector<128x128xf32>
    %cst_19 = arith.constant dense<0.000000e+00> : vector<1x128xf32>
    %24 = tpu.matmul %21, %23, %cst_19 {dimension_numbers = #tpu.dot_dimension_numbers<[1], [0], [0], [1], [0, 0, 1, 1], [], []>} : vector<1x128xf32>, vector<128x128xf32>, vector<1x128xf32> -> vector<1x128xf32>
    %25 = arith.addf %20, %24 : vector<1x128xf32>
    %26 = vector.extract_strided_slice %9 {offsets = [3, 0], sizes = [1, 128], strides = [1, 1]} : vector<8x128xf32> to vector<1x128xf32>
    %c3 = arith.constant 3 : index
    %c0_20 = arith.constant 0 : index
    %c0_21 = arith.constant 0 : index
    %27 = vector.load %arg3[%c3, %c0_20, %c0_21] : memref<8x128x128xf32, #tpu.memory_space<vmem>>, vector<1x128x128xf32>
    %28 = vector.shape_cast %27 : vector<1x128x128xf32> to vector<128x128xf32>
    %cst_22 = arith.constant dense<0.000000e+00> : vector<1x128xf32>
    %29 = tpu.matmul %26, %28, %cst_22 {dimension_numbers = #tpu.dot_dimension_numbers<[1], [0], [0], [1], [0, 0, 1, 1], [], []>} : vector<1x128xf32>, vector<128x128xf32>, vector<1x128xf32> -> vector<1x128xf32>
    %30 = arith.addf %25, %29 : vector<1x128xf32>
    %31 = vector.extract_strided_slice %9 {offsets = [4, 0], sizes = [1, 128], strides = [1, 1]} : vector<8x128xf32> to vector<1x128xf32>
    %c4 = arith.constant 4 : index
    %c0_23 = arith.constant 0 : index
    %c0_24 = arith.constant 0 : index
    %32 = vector.load %arg3[%c4, %c0_23, %c0_24] : memref<8x128x128xf32, #tpu.memory_space<vmem>>, vector<1x128x128xf32>
    %33 = vector.shape_cast %32 : vector<1x128x128xf32> to vector<128x128xf32>
    %cst_25 = arith.constant dense<0.000000e+00> : vector<1x128xf32>
    %34 = tpu.matmul %31, %33, %cst_25 {dimension_numbers = #tpu.dot_dimension_numbers<[1], [0], [0], [1], [0, 0, 1, 1], [], []>} : vector<1x128xf32>, vector<128x128xf32>, vector<1x128xf32> -> vector<1x128xf32>
    %35 = arith.addf %30, %34 : vector<1x128xf32>
    %36 = vector.extract_strided_slice %9 {offsets = [5, 0], sizes = [1, 128], strides = [1, 1]} : vector<8x128xf32> to vector<1x128xf32>
    %c5 = arith.constant 5 : index
    %c0_26 = arith.constant 0 : index
    %c0_27 = arith.constant 0 : index
    %37 = vector.load %arg3[%c5, %c0_26, %c0_27] : memref<8x128x128xf32, #tpu.memory_space<vmem>>, vector<1x128x128xf32>
    %38 = vector.shape_cast %37 : vector<1x128x128xf32> to vector<128x128xf32>
    %cst_28 = arith.constant dense<0.000000e+00> : vector<1x128xf32>
    %39 = tpu.matmul %36, %38, %cst_28 {dimension_numbers = #tpu.dot_dimension_numbers<[1], [0], [0], [1], [0, 0, 1, 1], [], []>} : vector<1x128xf32>, vector<128x128xf32>, vector<1x128xf32> -> vector<1x128xf32>
    %40 = arith.addf %35, %39 : vector<1x128xf32>
    %41 = vector.extract_strided_slice %9 {offsets = [6, 0], sizes = [1, 128], strides = [1, 1]} : vector<8x128xf32> to vector<1x128xf32>
    %c6 = arith.constant 6 : index
    %c0_29 = arith.constant 0 : index
    %c0_30 = arith.constant 0 : index
    %42 = vector.load %arg3[%c6, %c0_29, %c0_30] : memref<8x128x128xf32, #tpu.memory_space<vmem>>, vector<1x128x128xf32>
    %43 = vector.shape_cast %42 : vector<1x128x128xf32> to vector<128x128xf32>
    %cst_31 = arith.constant dense<0.000000e+00> : vector<1x128xf32>
    %44 = tpu.matmul %41, %43, %cst_31 {dimension_numbers = #tpu.dot_dimension_numbers<[1], [0], [0], [1], [0, 0, 1, 1], [], []>} : vector<1x128xf32>, vector<128x128xf32>, vector<1x128xf32> -> vector<1x128xf32>
    %45 = arith.addf %40, %44 : vector<1x128xf32>
    %46 = vector.extract_strided_slice %9 {offsets = [7, 0], sizes = [1, 128], strides = [1, 1]} : vector<8x128xf32> to vector<1x128xf32>
    %c7 = arith.constant 7 : index
    %c0_32 = arith.constant 0 : index
    %c0_33 = arith.constant 0 : index
    %47 = vector.load %arg3[%c7, %c0_32, %c0_33] : memref<8x128x128xf32, #tpu.memory_space<vmem>>, vector<1x128x128xf32>
    %48 = vector.shape_cast %47 : vector<1x128x128xf32> to vector<128x128xf32>
    %cst_34 = arith.constant dense<0.000000e+00> : vector<1x128xf32>
    %49 = tpu.matmul %46, %48, %cst_34 {dimension_numbers = #tpu.dot_dimension_numbers<[1], [0], [0], [1], [0, 0, 1, 1], [], []>} : vector<1x128xf32>, vector<128x128xf32>, vector<1x128xf32> -> vector<1x128xf32>
    %50 = arith.addf %45, %49 : vector<1x128xf32>
    %c0_35 = arith.constant 0 : index
    %c0_36 = arith.constant 0 : index
    %51 = vector.load %arg6[%c0_35, %c0_36] : memref<1x128xf32, #tpu.memory_space<vmem>>, vector<1x128xf32>
    tpu.vector_store %arg6[%c0_35, %c0_36], %50 {strides = array<i32>} : memref<1x128xf32, #tpu.memory_space<vmem>>, vector<1x128xf32>,
    return
  }
}

</mosaic_0001>

<llo_original>
// kernel: tile.8
$region0: #{tile.8}
  #allocation0 [shape = 's32[1]{0}', space=sflag, size = 0x4, scoped, tag = 'scoped memory for tile.8']
  %s0 = inlined_call_operand.vmem [shape: f32[64], index: 0, kind: input, shape index: {}]
  %s1 = inlined_call_operand.vmem [shape: f32[2,64], index: 1, kind: output, shape index: {}]
  // Predicated region
  $region2: #{tile.8} parent=0 // pred_check
    _
  $region3: #{tile.8} parent=0 // pred_check_branch
    %3 = sbr.rel (0) target = $region5
  $region4: #{tile.8} parent=0 // pred_region
    _
  $region5: #{tile.8} parent=0 // pred_fallthru
    _
  %v4 = vld [vmem:[%s0] ss:$0 sm:$0xff]
  %5 = vst [vmem:[%s1] sm:$0x3] %v4

// kernel: tile.9
$region0: #{tile.9}
  %s0 = inlined_call_operand.vmem [shape: f32[2,64], index: 0, kind: input, shape index: {}]
  %s1 = inlined_call_operand.vmem [shape: f32[1,128], index: 1, kind: output, shape index: {}]
  $region1: #{tile.9} parent=0
    #allocation0 [shape = 'u8[4096]{0}', space=vmem, size = 0x1000, scoped, tag = 'scoped mem for output reshape']
    #allocation1 [shape = 'u8[4096]{0}', space=vmem, size = 0x1000, scoped, tag = 'scoped mem for input reshape']
    %s3 = sshllo.u32 0, 2
    %v4 = vld [vmem:[%s0] sm:%s3]
    %5 = vst [vmem:[#allocation1] sm:%s3] %v4
    %v6 = vld [vmem:[#allocation1] sm:$0x1]
    %vm7 = vcmask 523264
    %8 = vst.msk [vmem:[#allocation0] sm:$0x1] %vm7, %v6
    %s9 = scalar_lea.vmem [#allocation1], 1
    %v10 = vld [vmem:[%s9] sm:$0x1]
    %11 = vrot.lane.b32.xlu0 %v10, 64
    %v12 = vpop.permute.xlu0 %11
    %vm13 = vcmask 1048064
    %14 = vst.msk [vmem:[#allocation0] sm:$0x1] %vm13, %v12
    %s16 = sshllo.u32 0, 1
    %v18 = vld [vmem:[#allocation0] sm:%s16]
    %s19 = sshllo.u32 0, 1
    %20 = vst [vmem:[%s1] sm:%s19] %v18

// kernel: sequential_wrapper_forward.1
$region0: #{sequential_wrapper_forward.1}
  #allocation0 [shape = 'u32[]', space=smem, size = 0x4, offset = 0x4, fixed_abs, tag = 'smem constant byte address 0x4 - core index']
  #allocation1 [shape = 'u32[144,128]{1,0:T(1,128)}', space=vmem, size = 0x12000, scoped, tag = 'internal scratch']
  %s0 = inlined_call_operand.vmem [shape: f32[128,36], index: 0, kind: input, shape index: {}]
  %s1 = inlined_call_operand.vmem [shape: f32[32,36], index: 1, kind: input, shape index: {}]
  %s2 = inlined_call_operand.vmem [shape: f32[32,1], index: 2, kind: input, shape index: {}]
  %s3 = inlined_call_operand.vmem [shape: f32[8,128,128], index: 3, kind: input, shape index: {}]
  %s4 = inlined_call_operand.vmem [shape: f32[1,128], index: 4, kind: input, shape index: {}]
  %s5 = inlined_call_operand.vmem [shape: f32[32,128], index: 5, kind: output, shape index: {0}]
  %s6 = inlined_call_operand.vmem [shape: f32[1,128], index: 6, kind: output, shape index: {1}]
  %7 = xla_tuple %s5, %s6
  %s8 = sld [smem:[#allocation0]]
  $region38: #{sequential_wrapper_forward.1} parent=0
    _
  %s10 = ssub.s32 1, %s8
  %s11 = scalar_select 0, %s10, %s8
  // Predicated region
  $region2: #{sequential_wrapper_forward.1} parent=0 // pred_check
    _
  $region3: #{sequential_wrapper_forward.1} parent=0 // pred_check_branch
    %13 = sbr.rel (0) target = $region5
  $region4: #{sequential_wrapper_forward.1} parent=0 // pred_region
    _
  $region5: #{sequential_wrapper_forward.1} parent=0 // pred_fallthru
    _
  // Predicated region
  $region6: #{sequential_wrapper_forward.1} parent=0 // pred_check
    _
  $region7: #{sequential_wrapper_forward.1} parent=0 // pred_check_branch
    %15 = sbr.rel (0) target = $region9
  $region8: #{sequential_wrapper_forward.1} parent=0 // pred_region
    _
  $region9: #{sequential_wrapper_forward.1} parent=0 // pred_fallthru
    _
  // Predicated region
  $region10: #{sequential_wrapper_forward.1} parent=0 // pred_check
    _
  $region11: #{sequential_wrapper_forward.1} parent=0 // pred_check_branch
    %17 = sbr.rel (0) target = $region13
  $region12: #{sequential_wrapper_forward.1} parent=0 // pred_region
    _
  $region13: #{sequential_wrapper_forward.1} parent=0 // pred_fallthru
    _
  // Predicated region
  $region14: #{sequential_wrapper_forward.1} parent=0 // pred_check
    _
  $region15: #{sequential_wrapper_forward.1} parent=0 // pred_check_branch
    %19 = sbr.rel (0) target = $region17
  $region16: #{sequential_wrapper_forward.1} parent=0 // pred_region
    _
  $region17: #{sequential_wrapper_forward.1} parent=0 // pred_fallthru
    _
  // Predicated region
  $region18: #{sequential_wrapper_forward.1} parent=0 // pred_check
    _
  $region19: #{sequential_wrapper_forward.1} parent=0 // pred_check_branch
    %21 = sbr.rel (0) target = $region21
  $region20: #{sequential_wrapper_forward.1} parent=0 // pred_region
    _
  $region21: #{sequential_wrapper_forward.1} parent=0 // pred_fallthru
    _
  %v22 = vld [vmem:[%s1] sm:$0xff]
  %v23 = vld [vmem:[%s1 + $0x8] sm:$0xff]
  %v24 = vld [vmem:[%s1 + $0x10] sm:$0xff]
  %v25 = vld [vmem:[%s1 + $0x18] sm:$0xff]
  %v26 = vld [vmem:[%s0] sm:$0xff]
  %v27 = vld [vmem:[%s0 + $0x8] sm:$0xff]
  %v28 = vld [vmem:[%s0 + $0x10] sm:$0xff]
  %v29 = vld [vmem:[%s0 + $0x18] sm:$0xff]
  %v30 = vld [vmem:[%s0 + $0x20] sm:$0xff]
  %v31 = vld [vmem:[%s0 + $0x28] sm:$0xff]
  %v32 = vld [vmem:[%s0 + $0x30] sm:$0xff]
  %v33 = vld [vmem:[%s0 + $0x38] sm:$0xff]
  %v34 = vld [vmem:[%s0 + $0x40] sm:$0xff]
  %v35 = vld [vmem:[%s0 + $0x48] sm:$0xff]
  %v36 = vld [vmem:[%s0 + $0x50] sm:$0xff]
  %v37 = vld [vmem:[%s0 + $0x58] sm:$0xff]
  %v38 = vld [vmem:[%s0 + $0x60] sm:$0xff]
  %v39 = vld [vmem:[%s0 + $0x68] sm:$0xff]
  %v40 = vld [vmem:[%s0 + $0x70] sm:$0xff]
  %v41 = vld [vmem:[%s0 + $0x78] sm:$0xff]
  %v42 = vld [vmem:[%s2] sm:$0xff]
  %v43 = vld [vmem:[%s2 + $0x8] sm:$0xff]
  %v44 = vld [vmem:[%s2 + $0x10] sm:$0xff]
  %v45 = vld [vmem:[%s2 + $0x18] sm:$0xff]
  %47 = vset.pattern.permute.xlu0 0
  %48 = vperm.xlu0 %47, %v42
  %v49 = vpop.permute.xlu0 %48
  %52 = vset.pattern.permute.xlu0 0
  %53 = vperm.xlu0 %52, %v43
  %v54 = vpop.permute.xlu0 %53
  %57 = vset.pattern.permute.xlu0 0
  %58 = vperm.xlu0 %57, %v44
  %v59 = vpop.permute.xlu0 %58
  %62 = vset.pattern.permute.xlu0 0
  %63 = vperm.xlu0 %62, %v45
  %v64 = vpop.permute.xlu0 %63
  %vm66 = vcmask 293888
  %v68 = vsel %vm66, %v22, 0
  %v71 = vsel %vm66, %v23, 0
  %v74 = vsel %vm66, %v24, 0
  %v77 = vsel %vm66, %v25, 0
  %v80 = vsel %vm66, %v26, 0
  %v83 = vsel %vm66, %v27, 0
  %v86 = vsel %vm66, %v28, 0
  %v89 = vsel %vm66, %v29, 0
  %v92 = vsel %vm66, %v30, 0
  %v95 = vsel %vm66, %v31, 0
  %v98 = vsel %vm66, %v32, 0
  %v101 = vsel %vm66, %v33, 0
  %v104 = vsel %vm66, %v34, 0
  %v107 = vsel %vm66, %v35, 0
  %v110 = vsel %vm66, %v36, 0
  %v113 = vsel %vm66, %v37, 0
  %v116 = vsel %vm66, %v38, 0
  %v119 = vsel %vm66, %v39, 0
  %v122 = vsel %vm66, %v40, 0
  %v125 = vsel %vm66, %v41, 0
  %127 = vmatprep.subr.mxu0 0.0
  %128 = vmatpush1.xpose.msra.mxu0 %v80
  %129 = vmatprep.subr.mxu0 0.0
  %130 = vmatpush1.xpose.msra.mxu0 %v83
  %131 = vmatprep.subr.mxu0 0.0
  %132 = vmatpush1.xpose.msra.mxu0 %v86
  %133 = vmatprep.subr.mxu0 0.0
  %134 = vmatpush1.xpose.msra.mxu0 %v89
  %135 = vmatprep.subr.mxu0 0.0
  %136 = vmatpush1.xpose.msra.mxu0 %v92
  %137 = vmatprep.subr.mxu0 0.0
  %138 = vmatpush1.xpose.msra.mxu0 %v95
  %139 = vmatprep.subr.mxu0 0.0
  %140 = vmatpush1.xpose.msra.mxu0 %v98
  %141 = vmatprep.subr.mxu0 0.0
  %142 = vmatpush1.xpose.msra.mxu0 %v101
  %143 = vmatprep.subr.mxu0 0.0
  %144 = vmatpush1.xpose.msra.mxu0 %v104
  %145 = vmatprep.subr.mxu0 0.0
  %146 = vmatpush1.xpose.msra.mxu0 %v107
  %147 = vmatprep.subr.mxu0 0.0
  %148 = vmatpush1.xpose.msra.mxu0 %v110
  %149 = vmatprep.subr.mxu0 0.0
  %150 = vmatpush1.xpose.msra.mxu0 %v113
  %151 = vmatprep.subr.mxu0 0.0
  %152 = vmatpush1.xpose.msra.mxu0 %v116
  %153 = vmatprep.subr.mxu0 0.0
  %154 = vmatpush1.xpose.msra.mxu0 %v119
  %155 = vmatprep.subr.mxu0 0.0
  %156 = vmatpush1.xpose.msra.mxu0 %v122
  %157 = vmatprep.subr.mxu0 0.0
  %158 = vmatpush1.xpose.msra.mxu0 %v125
  %159 = vmatprep.subr.mxu0 0.0
  %160 = vmatpush1.xpose.msra.mxu0 0.0
  %161 = vmatprep.subr.mxu0 0.0
  %162 = vmatpush1.xpose.msra.mxu0 0.0
  %163 = vmatprep.subr.mxu0 0.0
  %164 = vmatpush1.xpose.msra.mxu0 0.0
  %165 = vmatprep.subr.mxu0 0.0
  %166 = vmatpush1.xpose.msra.mxu0 0.0
  %167 = vmatprep.subr.mxu0 0.0
  %168 = vmatpush1.xpose.msra.mxu0 0.0
  %169 = vmatprep.subr.mxu0 0.0
  %170 = vmatpush1.xpose.msra.mxu0 0.0
  %171 = vmatprep.subr.mxu0 0.0
  %172 = vmatpush1.xpose.msra.mxu0 0.0
  %173 = vmatprep.subr.mxu0 0.0
  %174 = vmatpush1.xpose.msra.mxu0 0.0
  %175 = vmatprep.subr.mxu0 0.0
  %176 = vmatpush1.xpose.msra.mxu0 0.0
  %177 = vmatprep.subr.mxu0 0.0
  %178 = vmatpush1.xpose.msra.mxu0 0.0
  %179 = vmatprep.subr.mxu0 0.0
  %180 = vmatpush1.xpose.msra.mxu0 0.0
  %181 = vmatprep.subr.mxu0 0.0
  %182 = vmatpush1.xpose.msra.mxu0 0.0
  %183 = vmatprep.subr.mxu0 0.0
  %184 = vmatpush1.xpose.msra.mxu0 0.0
  %185 = vmatprep.subr.mxu0 0.0
  %186 = vmatpush1.xpose.msra.mxu0 0.0
  %187 = vmatprep.subr.mxu0 0.0
  %188 = vmatpush1.xpose.msra.mxu0 0.0
  %189 = vmatprep.subr.mxu0 0.0
  %190 = vmatpush1.xpose.msra.mxu0 0.0
  %191 = vmatprep.mubr.f32.mxu0 0.0
  %192 = vmatmul.mubr.f32.gmra.mrb[0].mxu0 %v68
  %v193 = vpop.f32.mrb[0].mxu0
  %v194 = vadd.f32 %v49, %v193
  %v195 = vpop.f32.mrb[0].mxu0
  %196 = vmatprep.mubr.f32.mxu0 0.0
  %197 = vmatmul.mubr.f32.gmra.mrb[0].mxu0 %v71
  %v198 = vpop.f32.mrb[0].mxu0
  %v199 = vadd.f32 %v54, %v198
  %v200 = vpop.f32.mrb[0].mxu0
  %201 = vmatprep.mubr.f32.mxu0 0.0
  %202 = vmatmul.mubr.f32.gmra.mrb[0].mxu0 %v74
  %v203 = vpop.f32.mrb[0].mxu0
  %v204 = vadd.f32 %v59, %v203
  %v205 = vpop.f32.mrb[0].mxu0
  %206 = vmatprep.mubr.f32.mxu0 0.0
  %207 = vmatmul.mubr.f32.gmra.mrb[0].mxu0 %v77
  %v208 = vpop.f32.mrb[0].mxu0
  %v209 = vadd.f32 %v64, %v208
  %v210 = vpop.f32.mrb[0].mxu0
  %211 = vdwg.mxu0
  %212 = vst [vmem:[%s5] sm:$0xff] %v194
  %213 = vst [vmem:[%s5 + $0x8] sm:$0xff] %v199
  %214 = vst [vmem:[%s5 + $0x10] sm:$0xff] %v204
  %215 = vst [vmem:[%s5 + $0x18] sm:$0xff] %v209
  %v216 = vmax.f32 %v194, 0.0
  %v217 = vld [vmem:[%s4] sm:$0x1]
  %v218 = vld [vmem:[%s3] sm:$0xff]
  %v219 = vld [vmem:[%s3 + $0x8] sm:$0xff]
  %v220 = vld [vmem:[%s3 + $0x10] sm:$0xff]
  %v221 = vld [vmem:[%s3 + $0x18] sm:$0xff]
  %v222 = vld [vmem:[%s3 + $0x20] sm:$0xff]
  %v223 = vld [vmem:[%s3 + $0x28] sm:$0xff]
  %v224 = vld [vmem:[%s3 + $0x30] sm:$0xff]
  %v225 = vld [vmem:[%s3 + $0x38] sm:$0xff]
  %v226 = vld [vmem:[%s3 + $0x40] sm:$0xff]
  %v227 = vld [vmem:[%s3 + $0x48] sm:$0xff]
  %v228 = vld [vmem:[%s3 + $0x50] sm:$0xff]
  %v229 = vld [vmem:[%s3 + $0x58] sm:$0xff]
  %v230 = vld [vmem:[%s3 + $0x60] sm:$0xff]
  %v231 = vld [vmem:[%s3 + $0x68] sm:$0xff]
  %v232 = vld [vmem:[%s3 + $0x70] sm:$0xff]
  %v233 = vld [vmem:[%s3 + $0x78] sm:$0xff]
  %234 = vmatprep.subr.mxu0 0.0
  %235 = vmatpush1.msra.mxu0 %v218
  %236 = vmatprep.subr.mxu0 0.0
  %237 = vmatpush1.msra.mxu0 %v219
  %238 = vmatprep.subr.mxu0 0.0
  %239 = vmatpush1.msra.mxu0 %v220
  %240 = vmatprep.subr.mxu0 0.0
  %241 = vmatpush1.msra.mxu0 %v221
  %242 = vmatprep.subr.mxu0 0.0
  %243 = vmatpush1.msra.mxu0 %v222
  %244 = vmatprep.subr.mxu0 0.0
  %245 = vmatpush1.msra.mxu0 %v223
  %246 = vmatprep.subr.mxu0 0.0
  %247 = vmatpush1.msra.mxu0 %v224
  %248 = vmatprep.subr.mxu0 0.0
  %249 = vmatpush1.msra.mxu0 %v225
  %250 = vmatprep.subr.mxu0 0.0
  %251 = vmatpush1.msra.mxu0 %v226
  %252 = vmatprep.subr.mxu0 0.0
  %253 = vmatpush1.msra.mxu0 %v227
  %254 = vmatprep.subr.mxu0 0.0
  %255 = vmatpush1.msra.mxu0 %v228
  %256 = vmatprep.subr.mxu0 0.0
  %257 = vmatpush1.msra.mxu0 %v229
  %258 = vmatprep.subr.mxu0 0.0
  %259 = vmatpush1.msra.mxu0 %v230
  %260 = vmatprep.subr.mxu0 0.0
  %261 = vmatpush1.msra.mxu0 %v231
  %262 = vmatprep.subr.mxu0 0.0
  %263 = vmatpush1.msra.mxu0 %v232
  %264 = vmatprep.subr.mxu0 0.0
  %265 = vmatpush1.msra.mxu0 %v233
  %266 = vmatprep.subr.mxu0 0.0
  %267 = vmatpush1.msra.mxu0 0.0
  %268 = vmatprep.subr.mxu0 0.0
  %269 = vmatpush1.msra.mxu0 0.0
  %270 = vmatprep.subr.mxu0 0.0
  %271 = vmatpush1.msra.mxu0 0.0
  %272 = vmatprep.subr.mxu0 0.0
  %273 = vmatpush1.msra.mxu0 0.0
  %274 = vmatprep.subr.mxu0 0.0
  %275 = vmatpush1.msra.mxu0 0.0
  %276 = vmatprep.subr.mxu0 0.0
  %277 = vmatpush1.msra.mxu0 0.0
  %278 = vmatprep.subr.mxu0 0.0
  %279 = vmatpush1.msra.mxu0 0.0
  %280 = vmatprep.subr.mxu0 0.0
  %281 = vmatpush1.msra.mxu0 0.0
  %282 = vmatprep.subr.mxu0 0.0
  %283 = vmatpush1.msra.mxu0 0.0
  %284 = vmatprep.subr.mxu0 0.0
  %285 = vmatpush1.msra.mxu0 0.0
  %286 = vmatprep.subr.mxu0 0.0
  %287 = vmatpush1.msra.mxu0 0.0
  %288 = vmatprep.subr.mxu0 0.0
  %289 = vmatpush1.msra.mxu0 0.0
  %290 = vmatprep.subr.mxu0 0.0
  %291 = vmatpush1.msra.mxu0 0.0
  %292 = vmatprep.subr.mxu0 0.0
  %293 = vmatpush1.msra.mxu0 0.0
  %294 = vmatprep.subr.mxu0 0.0
  %295 = vmatpush1.msra.mxu0 0.0
  %296 = vmatprep.subr.mxu0 0.0
  %297 = vmatpush1.msra.mxu0 0.0
  %298 = vmatprep.mubr.f32.mxu0 0.0
  %299 = vmatmul.mubr.f32.gmra.mrb[0].mxu0 %v216
  %v300 = vpop.f32.mrb[0].mxu0
  %v301 = vadd.f32 0.0, %v300
  %v302 = vpop.f32.mrb[0].mxu0
  %303 = vdwg.mxu0
  %v304 = vadd.f32 %v217, %v301
  %s305 = scalar_lea.vmem %s3, 128
  %v306 = vld [vmem:[%s305] sm:$0xff]
  %v307 = vld [vmem:[%s305 + $0x8] sm:$0xff]
  %v308 = vld [vmem:[%s305 + $0x10] sm:$0xff]
  %v309 = vld [vmem:[%s305 + $0x18] sm:$0xff]
  %v310 = vld [vmem:[%s305 + $0x20] sm:$0xff]
  %v311 = vld [vmem:[%s305 + $0x28] sm:$0xff]
  %v312 = vld [vmem:[%s305 + $0x30] sm:$0xff]
  %v313 = vld [vmem:[%s305 + $0x38] sm:$0xff]
  %v314 = vld [vmem:[%s305 + $0x40] sm:$0xff]
  %v315 = vld [vmem:[%s305 + $0x48] sm:$0xff]
  %v316 = vld [vmem:[%s305 + $0x50] sm:$0xff]
  %v317 = vld [vmem:[%s305 + $0x58] sm:$0xff]
  %v318 = vld [vmem:[%s305 + $0x60] sm:$0xff]
  %v319 = vld [vmem:[%s305 + $0x68] sm:$0xff]
  %v320 = vld [vmem:[%s305 + $0x70] sm:$0xff]
  %v321 = vld [vmem:[%s305 + $0x78] sm:$0xff]
  %v323 = vrot.slane %v216, 1
  %325 = vmatprep.subr.mxu0 0.0
  %326 = vmatpush1.msra.mxu0 %v306
  %327 = vmatprep.subr.mxu0 0.0
  %328 = vmatpush1.msra.mxu0 %v307
  %329 = vmatprep.subr.mxu0 0.0
  %330 = vmatpush1.msra.mxu0 %v308
  %331 = vmatprep.subr.mxu0 0.0
  %332 = vmatpush1.msra.mxu0 %v309
  %333 = vmatprep.subr.mxu0 0.0
  %334 = vmatpush1.msra.mxu0 %v310
  %335 = vmatprep.subr.mxu0 0.0
  %336 = vmatpush1.msra.mxu0 %v311
  %337 = vmatprep.subr.mxu0 0.0
  %338 = vmatpush1.msra.mxu0 %v312
  %339 = vmatprep.subr.mxu0 0.0
  %340 = vmatpush1.msra.mxu0 %v313
  %341 = vmatprep.subr.mxu0 0.0
  %342 = vmatpush1.msra.mxu0 %v314
  %343 = vmatprep.subr.mxu0 0.0
  %344 = vmatpush1.msra.mxu0 %v315
  %345 = vmatprep.subr.mxu0 0.0
  %346 = vmatpush1.msra.mxu0 %v316
  %347 = vmatprep.subr.mxu0 0.0
  %348 = vmatpush1.msra.mxu0 %v317
  %349 = vmatprep.subr.mxu0 0.0
  %350 = vmatpush1.msra.mxu0 %v318
  %351 = vmatprep.subr.mxu0 0.0
  %352 = vmatpush1.msra.mxu0 %v319
  %353 = vmatprep.subr.mxu0 0.0
  %354 = vmatpush1.msra.mxu0 %v320
  %355 = vmatprep.subr.mxu0 0.0
  %356 = vmatpush1.msra.mxu0 %v321
  %357 = vmatprep.subr.mxu0 0.0
  %358 = vmatpush1.msra.mxu0 0.0
  %359 = vmatprep.subr.mxu0 0.0
  %360 = vmatpush1.msra.mxu0 0.0
  %361 = vmatprep.subr.mxu0 0.0
  %362 = vmatpush1.msra.mxu0 0.0
  %363 = vmatprep.subr.mxu0 0.0
  %364 = vmatpush1.msra.mxu0 0.0
  %365 = vmatprep.subr.mxu0 0.0
  %366 = vmatpush1.msra.mxu0 0.0
  %367 = vmatprep.subr.mxu0 0.0
  %368 = vmatpush1.msra.mxu0 0.0
  %369 = vmatprep.subr.mxu0 0.0
  %370 = vmatpush1.msra.mxu0 0.0
  %371 = vmatprep.subr.mxu0 0.0
  %372 = vmatpush1.msra.mxu0 0.0
  %373 = vmatprep.subr.mxu0 0.0
  %374 = vmatpush1.msra.mxu0 0.0
  %375 = vmatprep.subr.mxu0 0.0
  %376 = vmatpush1.msra.mxu0 0.0
  %377 = vmatprep.subr.mxu0 0.0
  %378 = vmatpush1.msra.mxu0 0.0
  %379 = vmatprep.subr.mxu0 0.0
  %380 = vmatpush1.msra.mxu0 0.0
  %381 = vmatprep.subr.mxu0 0.0
  %382 = vmatpush1.msra.mxu0 0.0
  %383 = vmatprep.subr.mxu0 0.0
  %384 = vmatpush1.msra.mxu0 0.0
  %385 = vmatprep.subr.mxu0 0.0
  %386 = vmatpush1.msra.mxu0 0.0
  %387 = vmatprep.subr.mxu0 0.0
  %388 = vmatpush1.msra.mxu0 0.0
  %389 = vmatprep.mubr.f32.mxu0 0.0
  %390 = vmatmul.mubr.f32.gmra.mrb[0].mxu0 %v323
  %v391 = vpop.f32.mrb[0].mxu0
  %v392 = vadd.f32 0.0, %v391
  %v393 = vpop.f32.mrb[0].mxu0
  %394 = vdwg.mxu0
  %v395 = vadd.f32 %v304, %v392
  %s396 = scalar_lea.vmem %s3, 256
  %v397 = vld [vmem:[%s396] sm:$0xff]
  %v398 = vld [vmem:[%s396 + $0x8] sm:$0xff]
  %v399 = vld [vmem:[%s396 + $0x10] sm:$0xff]
  %v400 = vld [vmem:[%s396 + $0x18] sm:$0xff]
  %v401 = vld [vmem:[%s396 + $0x20] sm:$0xff]
  %v402 = vld [vmem:[%s396 + $0x28] sm:$0xff]
  %v403 = vld [vmem:[%s396 + $0x30] sm:$0xff]
  %v404 = vld [vmem:[%s396 + $0x38] sm:$0xff]
  %v405 = vld [vmem:[%s396 + $0x40] sm:$0xff]
  %v406 = vld [vmem:[%s396 + $0x48] sm:$0xff]
  %v407 = vld [vmem:[%s396 + $0x50] sm:$0xff]
  %v408 = vld [vmem:[%s396 + $0x58] sm:$0xff]
  %v409 = vld [vmem:[%s396 + $0x60] sm:$0xff]
  %v410 = vld [vmem:[%s396 + $0x68] sm:$0xff]
  %v411 = vld [vmem:[%s396 + $0x70] sm:$0xff]
  %v412 = vld [vmem:[%s396 + $0x78] sm:$0xff]
  %v413 = vrot.slane %v216, 2
  %415 = vmatprep.subr.mxu0 0.0
  %416 = vmatpush1.msra.mxu0 %v397
  %417 = vmatprep.subr.mxu0 0.0
  %418 = vmatpush1.msra.mxu0 %v398
  %419 = vmatprep.subr.mxu0 0.0
  %420 = vmatpush1.msra.mxu0 %v399
  %421 = vmatprep.subr.mxu0 0.0
  %422 = vmatpush1.msra.mxu0 %v400
  %423 = vmatprep.subr.mxu0 0.0
  %424 = vmatpush1.msra.mxu0 %v401
  %425 = vmatprep.subr.mxu0 0.0
  %426 = vmatpush1.msra.mxu0 %v402
  %427 = vmatprep.subr.mxu0 0.0
  %428 = vmatpush1.msra.mxu0 %v403
  %429 = vmatprep.subr.mxu0 0.0
  %430 = vmatpush1.msra.mxu0 %v404
  %431 = vmatprep.subr.mxu0 0.0
  %432 = vmatpush1.msra.mxu0 %v405
  %433 = vmatprep.subr.mxu0 0.0
  %434 = vmatpush1.msra.mxu0 %v406
  %435 = vmatprep.subr.mxu0 0.0
  %436 = vmatpush1.msra.mxu0 %v407
  %437 = vmatprep.subr.mxu0 0.0
  %438 = vmatpush1.msra.mxu0 %v408
  %439 = vmatprep.subr.mxu0 0.0
  %440 = vmatpush1.msra.mxu0 %v409
  %441 = vmatprep.subr.mxu0 0.0
  %442 = vmatpush1.msra.mxu0 %v410
  %443 = vmatprep.subr.mxu0 0.0
  %444 = vmatpush1.msra.mxu0 %v411
  %445 = vmatprep.subr.mxu0 0.0
  %446 = vmatpush1.msra.mxu0 %v412
  %447 = vmatprep.subr.mxu0 0.0
  %448 = vmatpush1.msra.mxu0 0.0
  %449 = vmatprep.subr.mxu0 0.0
  %450 = vmatpush1.msra.mxu0 0.0
  %451 = vmatprep.subr.mxu0 0.0
  %452 = vmatpush1.msra.mxu0 0.0
  %453 = vmatprep.subr.mxu0 0.0
  %454 = vmatpush1.msra.mxu0 0.0
  %455 = vmatprep.subr.mxu0 0.0
  %456 = vmatpush1.msra.mxu0 0.0
  %457 = vmatprep.subr.mxu0 0.0
  %458 = vmatpush1.msra.mxu0 0.0
  %459 = vmatprep.subr.mxu0 0.0
  %460 = vmatpush1.msra.mxu0 0.0
  %461 = vmatprep.subr.mxu0 0.0
  %462 = vmatpush1.msra.mxu0 0.0
  %463 = vmatprep.subr.mxu0 0.0
  %464 = vmatpush1.msra.mxu0 0.0
  %465 = vmatprep.subr.mxu0 0.0
  %466 = vmatpush1.msra.mxu0 0.0
  %467 = vmatprep.subr.mxu0 0.0
  %468 = vmatpush1.msra.mxu0 0.0
  %469 = vmatprep.subr.mxu0 0.0
  %470 = vmatpush1.msra.mxu0 0.0
  %471 = vmatprep.subr.mxu0 0.0
  %472 = vmatpush1.msra.mxu0 0.0
  %473 = vmatprep.subr.mxu0 0.0
  %474 = vmatpush1.msra.mxu0 0.0
  %475 = vmatprep.subr.mxu0 0.0
  %476 = vmatpush1.msra.mxu0 0.0
  %477 = vmatprep.subr.mxu0 0.0
  %478 = vmatpush1.msra.mxu0 0.0
  %479 = vmatprep.mubr.f32.mxu0 0.0
  %480 = vmatmul.mubr.f32.gmra.mrb[0].mxu0 %v413
  %v481 = vpop.f32.mrb[0].mxu0
  %v482 = vadd.f32 0.0, %v481
  %v483 = vpop.f32.mrb[0].mxu0
  %484 = vdwg.mxu0
  %v485 = vadd.f32 %v395, %v482
  %s486 = scalar_lea.vmem %s3, 384
  %v487 = vld [vmem:[%s486] sm:$0xff]
  %v488 = vld [vmem:[%s486 + $0x8] sm:$0xff]
  %v489 = vld [vmem:[%s486 + $0x10] sm:$0xff]
  %v490 = vld [vmem:[%s486 + $0x18] sm:$0xff]
  %v491 = vld [vmem:[%s486 + $0x20] sm:$0xff]
  %v492 = vld [vmem:[%s486 + $0x28] sm:$0xff]
  %v493 = vld [vmem:[%s486 + $0x30] sm:$0xff]
  %v494 = vld [vmem:[%s486 + $0x38] sm:$0xff]
  %v495 = vld [vmem:[%s486 + $0x40] sm:$0xff]
  %v496 = vld [vmem:[%s486 + $0x48] sm:$0xff]
  %v497 = vld [vmem:[%s486 + $0x50] sm:$0xff]
  %v498 = vld [vmem:[%s486 + $0x58] sm:$0xff]
  %v499 = vld [vmem:[%s486 + $0x60] sm:$0xff]
  %v500 = vld [vmem:[%s486 + $0x68] sm:$0xff]
  %v501 = vld [vmem:[%s486 + $0x70] sm:$0xff]
  %v502 = vld [vmem:[%s486 + $0x78] sm:$0xff]
  %v503 = vrot.slane %v216, 3
  %505 = vmatprep.subr.mxu0 0.0
  %506 = vmatpush1.msra.mxu0 %v487
  %507 = vmatprep.subr.mxu0 0.0
  %508 = vmatpush1.msra.mxu0 %v488
  %509 = vmatprep.subr.mxu0 0.0
  %510 = vmatpush1.msra.mxu0 %v489
  %511 = vmatprep.subr.mxu0 0.0
  %512 = vmatpush1.msra.mxu0 %v490
  %513 = vmatprep.subr.mxu0 0.0
  %514 = vmatpush1.msra.mxu0 %v491
  %515 = vmatprep.subr.mxu0 0.0
  %516 = vmatpush1.msra.mxu0 %v492
  %517 = vmatprep.subr.mxu0 0.0
  %518 = vmatpush1.msra.mxu0 %v493
  %519 = vmatprep.subr.mxu0 0.0
  %520 = vmatpush1.msra.mxu0 %v494
  %521 = vmatprep.subr.mxu0 0.0
  %522 = vmatpush1.msra.mxu0 %v495
  %523 = vmatprep.subr.mxu0 0.0
  %524 = vmatpush1.msra.mxu0 %v496
  %525 = vmatprep.subr.mxu0 0.0
  %526 = vmatpush1.msra.mxu0 %v497
  %527 = vmatprep.subr.mxu0 0.0
  %528 = vmatpush1.msra.mxu0 %v498
  %529 = vmatprep.subr.mxu0 0.0
  %530 = vmatpush1.msra.mxu0 %v499
  %531 = vmatprep.subr.mxu0 0.0
  %532 = vmatpush1.msra.mxu0 %v500
  %533 = vmatprep.subr.mxu0 0.0
  %534 = vmatpush1.msra.mxu0 %v501
  %535 = vmatprep.subr.mxu0 0.0
  %536 = vmatpush1.msra.mxu0 %v502
  %537 = vmatprep.subr.mxu0 0.0
  %538 = vmatpush1.msra.mxu0 0.0
  %539 = vmatprep.subr.mxu0 0.0
  %540 = vmatpush1.msra.mxu0 0.0
  %541 = vmatprep.subr.mxu0 0.0
  %542 = vmatpush1.msra.mxu0 0.0
  %543 = vmatprep.subr.mxu0 0.0
  %544 = vmatpush1.msra.mxu0 0.0
  %545 = vmatprep.subr.mxu0 0.0
  %546 = vmatpush1.msra.mxu0 0.0
  %547 = vmatprep.subr.mxu0 0.0
  %548 = vmatpush1.msra.mxu0 0.0
  %549 = vmatprep.subr.mxu0 0.0
  %550 = vmatpush1.msra.mxu0 0.0
  %551 = vmatprep.subr.mxu0 0.0
  %552 = vmatpush1.msra.mxu0 0.0
  %553 = vmatprep.subr.mxu0 0.0
  %554 = vmatpush1.msra.mxu0 0.0
  %555 = vmatprep.subr.mxu0 0.0
  %556 = vmatpush1.msra.mxu0 0.0
  %557 = vmatprep.subr.mxu0 0.0
  %558 = vmatpush1.msra.mxu0 0.0
  %559 = vmatprep.subr.mxu0 0.0
  %560 = vmatpush1.msra.mxu0 0.0
  %561 = vmatprep.subr.mxu0 0.0
  %562 = vmatpush1.msra.mxu0 0.0
  %563 = vmatprep.subr.mxu0 0.0
  %564 = vmatpush1.msra.mxu0 0.0
  %565 = vmatprep.subr.mxu0 0.0
  %566 = vmatpush1.msra.mxu0 0.0
  %567 = vmatprep.subr.mxu0 0.0
  %568 = vmatpush1.msra.mxu0 0.0
  %569 = vmatprep.mubr.f32.mxu0 0.0
  %570 = vmatmul.mubr.f32.gmra.mrb[0].mxu0 %v503
  %v571 = vpop.f32.mrb[0].mxu0
  %v572 = vadd.f32 0.0, %v571
  %v573 = vpop.f32.mrb[0].mxu0
  %574 = vdwg.mxu0
  %v575 = vadd.f32 %v485, %v572
  %s576 = scalar_lea.vmem %s3, 512
  %v577 = vld [vmem:[%s576] sm:$0xff]
  %v578 = vld [vmem:[%s576 + $0x8] sm:$0xff]
  %v579 = vld [vmem:[%s576 + $0x10] sm:$0xff]
  %v580 = vld [vmem:[%s576 + $0x18] sm:$0xff]
  %v581 = vld [vmem:[%s576 + $0x20] sm:$0xff]
  %v582 = vld [vmem:[%s576 + $0x28] sm:$0xff]
  %v583 = vld [vmem:[%s576 + $0x30] sm:$0xff]
  %v584 = vld [vmem:[%s576 + $0x38] sm:$0xff]
  %v585 = vld [vmem:[%s576 + $0x40] sm:$0xff]
  %v586 = vld [vmem:[%s576 + $0x48] sm:$0xff]
  %v587 = vld [vmem:[%s576 + $0x50] sm:$0xff]
  %v588 = vld [vmem:[%s576 + $0x58] sm:$0xff]
  %v589 = vld [vmem:[%s576 + $0x60] sm:$0xff]
  %v590 = vld [vmem:[%s576 + $0x68] sm:$0xff]
  %v591 = vld [vmem:[%s576 + $0x70] sm:$0xff]
  %v592 = vld [vmem:[%s576 + $0x78] sm:$0xff]
  %v593 = vrot.slane %v216, 4
  %595 = vmatprep.subr.mxu0 0.0
  %596 = vmatpush1.msra.mxu0 %v577
  %597 = vmatprep.subr.mxu0 0.0
  %598 = vmatpush1.msra.mxu0 %v578
  %599 = vmatprep.subr.mxu0 0.0
  %600 = vmatpush1.msra.mxu0 %v579
  %601 = vmatprep.subr.mxu0 0.0
  %602 = vmatpush1.msra.mxu0 %v580
  %603 = vmatprep.subr.mxu0 0.0
  %604 = vmatpush1.msra.mxu0 %v581
  %605 = vmatprep.subr.mxu0 0.0
  %606 = vmatpush1.msra.mxu0 %v582
  %607 = vmatprep.subr.mxu0 0.0
  %608 = vmatpush1.msra.mxu0 %v583
  %609 = vmatprep.subr.mxu0 0.0
  %610 = vmatpush1.msra.mxu0 %v584
  %611 = vmatprep.subr.mxu0 0.0
  %612 = vmatpush1.msra.mxu0 %v585
  %613 = vmatprep.subr.mxu0 0.0
  %614 = vmatpush1.msra.mxu0 %v586
  %615 = vmatprep.subr.mxu0 0.0
  %616 = vmatpush1.msra.mxu0 %v587
  %617 = vmatprep.subr.mxu0 0.0
  %618 = vmatpush1.msra.mxu0 %v588
  %619 = vmatprep.subr.mxu0 0.0
  %620 = vmatpush1.msra.mxu0 %v589
  %621 = vmatprep.subr.mxu0 0.0
  %622 = vmatpush1.msra.mxu0 %v590
  %623 = vmatprep.subr.mxu0 0.0
  %624 = vmatpush1.msra.mxu0 %v591
  %625 = vmatprep.subr.mxu0 0.0
  %626 = vmatpush1.msra.mxu0 %v592
  %627 = vmatprep.subr.mxu0 0.0
  %628 = vmatpush1.msra.mxu0 0.0
  %629 = vmatprep.subr.mxu0 0.0
  %630 = vmatpush1.msra.mxu0 0.0
  %631 = vmatprep.subr.mxu0 0.0
  %632 = vmatpush1.msra.mxu0 0.0
  %633 = vmatprep.subr.mxu0 0.0
  %634 = vmatpush1.msra.mxu0 0.0
  %635 = vmatprep.subr.mxu0 0.0
  %636 = vmatpush1.msra.mxu0 0.0
  %637 = vmatprep.subr.mxu0 0.0
  %638 = vmatpush1.msra.mxu0 0.0
  %639 = vmatprep.subr.mxu0 0.0
  %640 = vmatpush1.msra.mxu0 0.0
  %641 = vmatprep.subr.mxu0 0.0
  %642 = vmatpush1.msra.mxu0 0.0
  %643 = vmatprep.subr.mxu0 0.0
  %644 = vmatpush1.msra.mxu0 0.0
  %645 = vmatprep.subr.mxu0 0.0
  %646 = vmatpush1.msra.mxu0 0.0
  %647 = vmatprep.subr.mxu0 0.0
  %648 = vmatpush1.msra.mxu0 0.0
  %649 = vmatprep.subr.mxu0 0.0
  %650 = vmatpush1.msra.mxu0 0.0
  %651 = vmatprep.subr.mxu0 0.0
  %652 = vmatpush1.msra.mxu0 0.0
  %653 = vmatprep.subr.mxu0 0.0
  %654 = vmatpush1.msra.mxu0 0.0
  %655 = vmatprep.subr.mxu0 0.0
  %656 = vmatpush1.msra.mxu0 0.0
  %657 = vmatprep.subr.mxu0 0.0
  %658 = vmatpush1.msra.mxu0 0.0
  %659 = vmatprep.mubr.f32.mxu0 0.0
  %660 = vmatmul.mubr.f32.gmra.mrb[0].mxu0 %v593
  %v661 = vpop.f32.mrb[0].mxu0
  %v662 = vadd.f32 0.0, %v661
  %v663 = vpop.f32.mrb[0].mxu0
  %664 = vdwg.mxu0
  %v665 = vadd.f32 %v575, %v662
  %s666 = scalar_lea.vmem %s3, 640
  %v667 = vld [vmem:[%s666] sm:$0xff]
  %v668 = vld [vmem:[%s666 + $0x8] sm:$0xff]
  %v669 = vld [vmem:[%s666 + $0x10] sm:$0xff]
  %v670 = vld [vmem:[%s666 + $0x18] sm:$0xff]
  %v671 = vld [vmem:[%s666 + $0x20] sm:$0xff]
  %v672 = vld [vmem:[%s666 + $0x28] sm:$0xff]
  %v673 = vld [vmem:[%s666 + $0x30] sm:$0xff]
  %v674 = vld [vmem:[%s666 + $0x38] sm:$0xff]
  %v675 = vld [vmem:[%s666 + $0x40] sm:$0xff]
  %v676 = vld [vmem:[%s666 + $0x48] sm:$0xff]
  %v677 = vld [vmem:[%s666 + $0x50] sm:$0xff]
  %v678 = vld [vmem:[%s666 + $0x58] sm:$0xff]
  %v679 = vld [vmem:[%s666 + $0x60] sm:$0xff]
  %v680 = vld [vmem:[%s666 + $0x68] sm:$0xff]
  %v681 = vld [vmem:[%s666 + $0x70] sm:$0xff]
  %v682 = vld [vmem:[%s666 + $0x78] sm:$0xff]
  %v683 = vrot.slane %v216, 5
  %685 = vmatprep.subr.mxu0 0.0
  %686 = vmatpush1.msra.mxu0 %v667
  %687 = vmatprep.subr.mxu0 0.0
  %688 = vmatpush1.msra.mxu0 %v668
  %689 = vmatprep.subr.mxu0 0.0
  %690 = vmatpush1.msra.mxu0 %v669
  %691 = vmatprep.subr.mxu0 0.0
  %692 = vmatpush1.msra.mxu0 %v670
  %693 = vmatprep.subr.mxu0 0.0
  %694 = vmatpush1.msra.mxu0 %v671
  %695 = vmatprep.subr.mxu0 0.0
  %696 = vmatpush1.msra.mxu0 %v672
  %697 = vmatprep.subr.mxu0 0.0
  %698 = vmatpush1.msra.mxu0 %v673
  %699 = vmatprep.subr.mxu0 0.0
  %700 = vmatpush1.msra.mxu0 %v674
  %701 = vmatprep.subr.mxu0 0.0
  %702 = vmatpush1.msra.mxu0 %v675
  %703 = vmatprep.subr.mxu0 0.0
  %704 = vmatpush1.msra.mxu0 %v676
  %705 = vmatprep.subr.mxu0 0.0
  %706 = vmatpush1.msra.mxu0 %v677
  %707 = vmatprep.subr.mxu0 0.0
  %708 = vmatpush1.msra.mxu0 %v678
  %709 = vmatprep.subr.mxu0 0.0
  %710 = vmatpush1.msra.mxu0 %v679
  %711 = vmatprep.subr.mxu0 0.0
  %712 = vmatpush1.msra.mxu0 %v680
  %713 = vmatprep.subr.mxu0 0.0
  %714 = vmatpush1.msra.mxu0 %v681
  %715 = vmatprep.subr.mxu0 0.0
  %716 = vmatpush1.msra.mxu0 %v682
  %717 = vmatprep.subr.mxu0 0.0
  %718 = vmatpush1.msra.mxu0 0.0
  %719 = vmatprep.subr.mxu0 0.0
  %720 = vmatpush1.msra.mxu0 0.0
  %721 = vmatprep.subr.mxu0 0.0
  %722 = vmatpush1.msra.mxu0 0.0
  %723 = vmatprep.subr.mxu0 0.0
  %724 = vmatpush1.msra.mxu0 0.0
  %725 = vmatprep.subr.mxu0 0.0
  %726 = vmatpush1.msra.mxu0 0.0
  %727 = vmatprep.subr.mxu0 0.0
  %728 = vmatpush1.msra.mxu0 0.0
  %729 = vmatprep.subr.mxu0 0.0
  %730 = vmatpush1.msra.mxu0 0.0
  %731 = vmatprep.subr.mxu0 0.0
  %732 = vmatpush1.msra.mxu0 0.0
  %733 = vmatprep.subr.mxu0 0.0
  %734 = vmatpush1.msra.mxu0 0.0
  %735 = vmatprep.subr.mxu0 0.0
  %736 = vmatpush1.msra.mxu0 0.0
  %737 = vmatprep.subr.mxu0 0.0
  %738 = vmatpush1.msra.mxu0 0.0
  %739 = vmatprep.subr.mxu0 0.0
  %740 = vmatpush1.msra.mxu0 0.0
  %741 = vmatprep.subr.mxu0 0.0
  %742 = vmatpush1.msra.mxu0 0.0
  %743 = vmatprep.subr.mxu0 0.0
  %744 = vmatpush1.msra.mxu0 0.0
  %745 = vmatprep.subr.mxu0 0.0
  %746 = vmatpush1.msra.mxu0 0.0
  %747 = vmatprep.subr.mxu0 0.0
  %748 = vmatpush1.msra.mxu0 0.0
  %749 = vmatprep.mubr.f32.mxu0 0.0
  %750 = vmatmul.mubr.f32.gmra.mrb[0].mxu0 %v683
  %v751 = vpop.f32.mrb[0].mxu0
  %v752 = vadd.f32 0.0, %v751
  %v753 = vpop.f32.mrb[0].mxu0
  %754 = vdwg.mxu0
  %v755 = vadd.f32 %v665, %v752
  %s756 = scalar_lea.vmem %s3, 768
  %v757 = vld [vmem:[%s756] sm:$0xff]
  %v758 = vld [vmem:[%s756 + $0x8] sm:$0xff]
  %v759 = vld [vmem:[%s756 + $0x10] sm:$0xff]
  %v760 = vld [vmem:[%s756 + $0x18] sm:$0xff]
  %v761 = vld [vmem:[%s756 + $0x20] sm:$0xff]
  %v762 = vld [vmem:[%s756 + $0x28] sm:$0xff]
  %v763 = vld [vmem:[%s756 + $0x30] sm:$0xff]
  %v764 = vld [vmem:[%s756 + $0x38] sm:$0xff]
  %v765 = vld [vmem:[%s756 + $0x40] sm:$0xff]
  %v766 = vld [vmem:[%s756 + $0x48] sm:$0xff]
  %v767 = vld [vmem:[%s756 + $0x50] sm:$0xff]
  %v768 = vld [vmem:[%s756 + $0x58] sm:$0xff]
  %v769 = vld [vmem:[%s756 + $0x60] sm:$0xff]
  %v770 = vld [vmem:[%s756 + $0x68] sm:$0xff]
  %v771 = vld [vmem:[%s756 + $0x70] sm:$0xff]
  %v772 = vld [vmem:[%s756 + $0x78] sm:$0xff]
  %v773 = vrot.slane %v216, 6
  %775 = vmatprep.subr.mxu0 0.0
  %776 = vmatpush1.msra.mxu0 %v757
  %777 = vmatprep.subr.mxu0 0.0
  %778 = vmatpush1.msra.mxu0 %v758
  %779 = vmatprep.subr.mxu0 0.0
  %780 = vmatpush1.msra.mxu0 %v759
  %781 = vmatprep.subr.mxu0 0.0
  %782 = vmatpush1.msra.mxu0 %v760
  %783 = vmatprep.subr.mxu0 0.0
  %784 = vmatpush1.msra.mxu0 %v761
  %785 = vmatprep.subr.mxu0 0.0
  %786 = vmatpush1.msra.mxu0 %v762
  %787 = vmatprep.subr.mxu0 0.0
  %788 = vmatpush1.msra.mxu0 %v763
  %789 = vmatprep.subr.mxu0 0.0
  %790 = vmatpush1.msra.mxu0 %v764
  %791 = vmatprep.subr.mxu0 0.0
  %792 = vmatpush1.msra.mxu0 %v765
  %793 = vmatprep.subr.mxu0 0.0
  %794 = vmatpush1.msra.mxu0 %v766
  %795 = vmatprep.subr.mxu0 0.0
  %796 = vmatpush1.msra.mxu0 %v767
  %797 = vmatprep.subr.mxu0 0.0
  %798 = vmatpush1.msra.mxu0 %v768
  %799 = vmatprep.subr.mxu0 0.0
  %800 = vmatpush1.msra.mxu0 %v769
  %801 = vmatprep.subr.mxu0 0.0
  %802 = vmatpush1.msra.mxu0 %v770
  %803 = vmatprep.subr.mxu0 0.0
  %804 = vmatpush1.msra.mxu0 %v771
  %805 = vmatprep.subr.mxu0 0.0
  %806 = vmatpush1.msra.mxu0 %v772
  %807 = vmatprep.subr.mxu0 0.0
  %808 = vmatpush1.msra.mxu0 0.0
  %809 = vmatprep.subr.mxu0 0.0
  %810 = vmatpush1.msra.mxu0 0.0
  %811 = vmatprep.subr.mxu0 0.0
  %812 = vmatpush1.msra.mxu0 0.0
  %813 = vmatprep.subr.mxu0 0.0
  %814 = vmatpush1.msra.mxu0 0.0
  %815 = vmatprep.subr.mxu0 0.0
  %816 = vmatpush1.msra.mxu0 0.0
  %817 = vmatprep.subr.mxu0 0.0
  %818 = vmatpush1.msra.mxu0 0.0
  %819 = vmatprep.subr.mxu0 0.0
  %820 = vmatpush1.msra.mxu0 0.0
  %821 = vmatprep.subr.mxu0 0.0
  %822 = vmatpush1.msra.mxu0 0.0
  %823 = vmatprep.subr.mxu0 0.0
  %824 = vmatpush1.msra.mxu0 0.0
  %825 = vmatprep.subr.mxu0 0.0
  %826 = vmatpush1.msra.mxu0 0.0
  %827 = vmatprep.subr.mxu0 0.0
  %828 = vmatpush1.msra.mxu0 0.0
  %829 = vmatprep.subr.mxu0 0.0
  %830 = vmatpush1.msra.mxu0 0.0
  %831 = vmatprep.subr.mxu0 0.0
  %832 = vmatpush1.msra.mxu0 0.0
  %833 = vmatprep.subr.mxu0 0.0
  %834 = vmatpush1.msra.mxu0 0.0
  %835 = vmatprep.subr.mxu0 0.0
  %836 = vmatpush1.msra.mxu0 0.0
  %837 = vmatprep.subr.mxu0 0.0
  %838 = vmatpush1.msra.mxu0 0.0
  %839 = vmatprep.mubr.f32.mxu0 0.0
  %840 = vmatmul.mubr.f32.gmra.mrb[0].mxu0 %v773
  %v841 = vpop.f32.mrb[0].mxu0
  %v842 = vadd.f32 0.0, %v841
  %v843 = vpop.f32.mrb[0].mxu0
  %844 = vdwg.mxu0
  %v845 = vadd.f32 %v755, %v842
  %s846 = scalar_lea.vmem %s3, 896
  %v847 = vld [vmem:[%s846] sm:$0xff]
  %v848 = vld [vmem:[%s846 + $0x8] sm:$0xff]
  %v849 = vld [vmem:[%s846 + $0x10] sm:$0xff]
  %v850 = vld [vmem:[%s846 + $0x18] sm:$0xff]
  %v851 = vld [vmem:[%s846 + $0x20] sm:$0xff]
  %v852 = vld [vmem:[%s846 + $0x28] sm:$0xff]
  %v853 = vld [vmem:[%s846 + $0x30] sm:$0xff]
  %v854 = vld [vmem:[%s846 + $0x38] sm:$0xff]
  %v855 = vld [vmem:[%s846 + $0x40] sm:$0xff]
  %v856 = vld [vmem:[%s846 + $0x48] sm:$0xff]
  %v857 = vld [vmem:[%s846 + $0x50] sm:$0xff]
  %v858 = vld [vmem:[%s846 + $0x58] sm:$0xff]
  %v859 = vld [vmem:[%s846 + $0x60] sm:$0xff]
  %v860 = vld [vmem:[%s846 + $0x68] sm:$0xff]
  %v861 = vld [vmem:[%s846 + $0x70] sm:$0xff]
  %v862 = vld [vmem:[%s846 + $0x78] sm:$0xff]
  %v863 = vrot.slane %v216, 7
  %865 = vmatprep.subr.mxu0 0.0
  %866 = vmatpush1.msra.mxu0 %v847
  %867 = vmatprep.subr.mxu0 0.0
  %868 = vmatpush1.msra.mxu0 %v848
  %869 = vmatprep.subr.mxu0 0.0
  %870 = vmatpush1.msra.mxu0 %v849
  %871 = vmatprep.subr.mxu0 0.0
  %872 = vmatpush1.msra.mxu0 %v850
  %873 = vmatprep.subr.mxu0 0.0
  %874 = vmatpush1.msra.mxu0 %v851
  %875 = vmatprep.subr.mxu0 0.0
  %876 = vmatpush1.msra.mxu0 %v852
  %877 = vmatprep.subr.mxu0 0.0
  %878 = vmatpush1.msra.mxu0 %v853
  %879 = vmatprep.subr.mxu0 0.0
  %880 = vmatpush1.msra.mxu0 %v854
  %881 = vmatprep.subr.mxu0 0.0
  %882 = vmatpush1.msra.mxu0 %v855
  %883 = vmatprep.subr.mxu0 0.0
  %884 = vmatpush1.msra.mxu0 %v856
  %885 = vmatprep.subr.mxu0 0.0
  %886 = vmatpush1.msra.mxu0 %v857
  %887 = vmatprep.subr.mxu0 0.0
  %888 = vmatpush1.msra.mxu0 %v858
  %889 = vmatprep.subr.mxu0 0.0
  %890 = vmatpush1.msra.mxu0 %v859
  %891 = vmatprep.subr.mxu0 0.0
  %892 = vmatpush1.msra.mxu0 %v860
  %893 = vmatprep.subr.mxu0 0.0
  %894 = vmatpush1.msra.mxu0 %v861
  %895 = vmatprep.subr.mxu0 0.0
  %896 = vmatpush1.msra.mxu0 %v862
  %897 = vmatprep.subr.mxu0 0.0
  %898 = vmatpush1.msra.mxu0 0.0
  %899 = vmatprep.subr.mxu0 0.0
  %900 = vmatpush1.msra.mxu0 0.0
  %901 = vmatprep.subr.mxu0 0.0
  %902 = vmatpush1.msra.mxu0 0.0
  %903 = vmatprep.subr.mxu0 0.0
  %904 = vmatpush1.msra.mxu0 0.0
  %905 = vmatprep.subr.mxu0 0.0
  %906 = vmatpush1.msra.mxu0 0.0
  %907 = vmatprep.subr.mxu0 0.0
  %908 = vmatpush1.msra.mxu0 0.0
  %909 = vmatprep.subr.mxu0 0.0
  %910 = vmatpush1.msra.mxu0 0.0
  %911 = vmatprep.subr.mxu0 0.0
  %912 = vmatpush1.msra.mxu0 0.0
  %913 = vmatprep.subr.mxu0 0.0
  %914 = vmatpush1.msra.mxu0 0.0
  %915 = vmatprep.subr.mxu0 0.0
  %916 = vmatpush1.msra.mxu0 0.0
  %917 = vmatprep.subr.mxu0 0.0
  %918 = vmatpush1.msra.mxu0 0.0
  %919 = vmatprep.subr.mxu0 0.0
  %920 = vmatpush1.msra.mxu0 0.0
  %921 = vmatprep.subr.mxu0 0.0
  %922 = vmatpush1.msra.mxu0 0.0
  %923 = vmatprep.subr.mxu0 0.0
  %924 = vmatpush1.msra.mxu0 0.0
  %925 = vmatprep.subr.mxu0 0.0
  %926 = vmatpush1.msra.mxu0 0.0
  %927 = vmatprep.subr.mxu0 0.0
  %928 = vmatpush1.msra.mxu0 0.0
  %929 = vmatprep.mubr.f32.mxu0 0.0
  %930 = vmatmul.mubr.f32.gmra.mrb[0].mxu0 %v863
  %v931 = vpop.f32.mrb[0].mxu0
  %v932 = vadd.f32 0.0, %v931
  %v933 = vpop.f32.mrb[0].mxu0
  %934 = vdwg.mxu0
  %v935 = vadd.f32 %v845, %v932
  %936 = vst [vmem:[%s6] sm:$0x1] %v935
  // Predicated region
  $region22: #{sequential_wrapper_forward.1} parent=0 // pred_check
    _
  $region23: #{sequential_wrapper_forward.1} parent=0 // pred_check_branch
    %938 = sbr.rel (0) target = $region25
  $region24: #{sequential_wrapper_forward.1} parent=0 // pred_region
    _
  $region25: #{sequential_wrapper_forward.1} parent=0 // pred_fallthru
    _
  // Predicated region
  $region26: #{sequential_wrapper_forward.1} parent=0 // pred_check
    _
  $region27: #{sequential_wrapper_forward.1} parent=0 // pred_check_branch
    %940 = sbr.rel (0) target = $region29
  $region28: #{sequential_wrapper_forward.1} parent=0 // pred_region
    _
  $region29: #{sequential_wrapper_forward.1} parent=0 // pred_fallthru
    _
  // Predicated region
  $region30: #{sequential_wrapper_forward.1} parent=0 // pred_check
    _
  $region31: #{sequential_wrapper_forward.1} parent=0 // pred_check_branch
    %942 = sbr.rel (0) target = $region33
  $region32: #{sequential_wrapper_forward.1} parent=0 // pred_region
    _
  $region33: #{sequential_wrapper_forward.1} parent=0 // pred_fallthru
    _
  // Predicated region
  $region34: #{sequential_wrapper_forward.1} parent=0 // pred_check
    _
  $region35: #{sequential_wrapper_forward.1} parent=0 // pred_check_branch
    %944 = sbr.rel (0) target = $region37
  $region36: #{sequential_wrapper_forward.1} parent=0 // pred_region
    _
  $region37: #{sequential_wrapper_forward.1} parent=0 // pred_fallthru
    _

</llo_original>
